<compile_context>
chip_gen: v7x
topology: tpu7x:2x2x1
jax: 0.10.0
libtpu: 0.0.40
codegen_flags: <defaults>
</compile_context>

<pallas_src>
import jax
import jax.numpy as jnp
from jax.experimental import pallas as pl
from jax.experimental.pallas import tpu as pltpu


def _dcr_kernel(theta_ref, bert_ref, center_ref, c_sq_ref, out_ref, acc_ref):
    j = pl.program_id(1)  # inner (sequential) doc-tile axis

    @pl.when(j == 0)
    def _init():
        acc_ref[...] = jnp.zeros_like(acc_ref)

    center = center_ref[...]                 # (K, D), native matmul dtype
    c_sq = c_sq_ref[...]                      # (K, 1), f32, hoisted to wrapper
    ones_row = jnp.ones((1, center.shape[1]), jnp.float32)   # hoisted, reused

    def doc_probs(x_ref):
        x = x_ref[...]                        # (tile_n, D), native dtype
        xf = x.astype(jnp.float32)
        # ||x||^2 as a (1, tile_n) lane row via a 1-row MXU pass (keeps the
        # docs-on-lanes orientation; avoids an XLU transpose of a lane reduce).
        x_sq = jax.lax.dot_general(
            ones_row, xf * xf,
            dimension_numbers=(((1,), (1,)), ((), ())),
            preferred_element_type=jnp.float32)               # (1, tile_n)
        # cdist matmul directly on the DMA'd tile (no staging copy, no upcast).
        cx = jax.lax.dot_general(
            center, x,
            dimension_numbers=(((1,), (1,)), ((), ())),
            preferred_element_type=jnp.float32)               # (K, tile_n)
        d2 = jnp.maximum(c_sq + x_sq - 2.0 * cx, 0.0)
        dist = jnp.sqrt(d2)                                   # (K, tile_n)
        # Per-document normalization (sum over clusters = sublane reduce).
        denom = jnp.sum(dist, axis=0, keepdims=True)          # (1, tile_n)
        denom = jnp.maximum(denom, jnp.float32(1e-30))        # degenerate guard
        inv = pl.reciprocal(denom, approx=True)               # EUP
        inv = inv * (2.0 - denom * inv)                       # Newton -> ~exact
        return jnp.clip(dist * inv, 1e-6, 1.0 - 1e-6)

    pt = doc_probs(theta_ref)                 # theta probabilities (K, tile_n)
    pb = doc_probs(bert_ref)                  # bert  probabilities (K, tile_n)

    # Symmetric KL, exact simplification: KL(a,b)+KL(b,a) = sum((a-b)(log a - log b)).
    sym = (pt - pb) * (jnp.log(pt) - jnp.log(pb))

    # Lane-dense accumulation: sublane-only reduce per step; cross-lane reduce
    # and the scalar store are deferred to the finalize step.
    acc_ref[...] += jnp.sum(sym, axis=0, keepdims=True)       # (1, tile_n)

    @pl.when(j == pl.num_programs(1) - 1)
    def _finalize():
        out_ref[...] = jnp.zeros_like(out_ref)
        out_ref[0:1, 0:1] = jnp.sum(acc_ref[...], axis=1, keepdims=True)


def dcr_loss(theta_prj, bert_emb, cluster_center, weight_loss_DCR, *,
             tile_n=None, num_core_splits=2, matmul_dtype=None):
    """Pallas implementation of DCR.forward.

    weight_loss_DCR is a compile-time hyperparameter (mirrors the PyTorch
    module); the early return below is a Python-level branch.
    `matmul_dtype=jnp.bfloat16` opts f32 callers into the half-HBM-traffic
    bf16 MXU path (norm/softmax math stays f32); default preserves the input
    dtype so f32 callers keep reference-level numerics.
    """
    if weight_loss_DCR <= 1e-6:
        return jnp.float32(0.0)

    N, D = theta_prj.shape
    K, Dc = cluster_center.shape
    assert Dc == D and bert_emb.shape == (N, D)

    # ---- dtypes ----------------------------------------------------------
    if matmul_dtype is not None:
        theta_prj = theta_prj.astype(matmul_dtype)
        bert_emb = bert_emb.astype(matmul_dtype)
    in_dtype = theta_prj.dtype
    bert_emb = bert_emb.astype(in_dtype)
    center = cluster_center.astype(in_dtype)
    # Hoisted squared cluster norms, in f32, from the exact values the MXU sees.
    c_sq = jnp.sum(jnp.square(center.astype(jnp.float32)), axis=1, keepdims=True)
    itemsize = theta_prj.dtype.itemsize

    # ---- generation-aware VMEM budget / tile sizing ----------------------
    try:
        info = pltpu.get_tpu_info()
        vmem_cap = int(getattr(info, "vmem_capacity_bytes", 64 * 1024 * 1024))
    except Exception:
        vmem_cap = 64 * 1024 * 1024          # conservative (v7x-sized) fallback
    vmem_limit = min((vmem_cap * 3) // 4, 100 * 1024 * 1024)

    if tile_n is None:
        resident = 2 * (K * D + K) * 4 + (64 << 10)      # centers + c_sq + slack
        budget = int(vmem_limit * 0.85) - resident
        per_row = 2 * 2 * D * itemsize + 4               # theta+bert, 2 bufs, + acc lane
        tile_n = budget // max(per_row, 1)
        tile_n = int(max(64, min(tile_n, 2048)))

    # Row tile: multiple of 8 sublanes, capped at (8-padded) N.
    tile_n = max(8, (min(int(tile_n), pl.cdiv(N, 8) * 8) // 8) * 8)

    # ---- grid: (outer parallel, inner arbitrary) over the doc axis -------
    n_tiles = pl.cdiv(N, tile_n)
    n_outer = max(1, min(int(num_core_splits), n_tiles))
    n_inner = pl.cdiv(n_tiles, n_outer)
    n_tiles = n_outer * n_inner
    n_pad = n_tiles * tile_n
    if n_pad != N:
        # Zero rows padded identically into theta and bert give identical
        # probability rows -> exactly zero symmetric-KL contribution.
        pad = ((0, n_pad - N), (0, 0))
        theta_prj = jnp.pad(theta_prj, pad)
        bert_emb = jnp.pad(bert_emb, pad)

    doc_map = lambda i, j: (i * n_inner + j, 0)

    out = pl.pallas_call(
        _dcr_kernel,
        out_shape=jax.ShapeDtypeStruct((8 * n_outer, 128), jnp.float32),
        grid_spec=pltpu.PrefetchScalarGridSpec(
            num_scalar_prefetch=0,
            grid=(n_outer, n_inner),
            in_specs=[
                pl.BlockSpec((tile_n, D), doc_map),            # theta tile
                pl.BlockSpec((tile_n, D), doc_map),            # bert tile
                pl.BlockSpec((K, D), lambda i, j: (0, 0)),     # centers, resident
                pl.BlockSpec((K, 1), lambda i, j: (0, 0)),     # ||c||^2, resident
            ],
            out_specs=pl.BlockSpec((8, 128), lambda i, j: (i, 0)),  # per-outer partial
            scratch_shapes=[pltpu.VMEM((1, tile_n), jnp.float32)],  # lane accumulator
        ),
        compiler_params=pltpu.CompilerParams(
            dimension_semantics=("parallel", "arbitrary"),
            vmem_limit_bytes=int(vmem_limit),
        ),
    )(theta_prj, bert_emb, center, c_sq)

    # Only [8*i, 0] entries are non-zero (blocks are explicitly zero-filled).
    return jnp.sum(out) * jnp.float32(0.5 * float(weight_loss_DCR))


def dcr_loss_ref(theta_prj, bert_emb, cluster_center, weight_loss_DCR):
    """Pure-JAX reference (mirrors the PyTorch module)."""
    if weight_loss_DCR <= 1e-6:
        return jnp.float32(0.0)

    def cdist(x, c):
        d2 = jnp.sum((x[:, None, :] - c[None, :, :]) ** 2, axis=-1)
        return jnp.sqrt(jnp.maximum(d2, 0.0))

    def kl(a, b):
        a = jnp.clip(a, 1e-6, 1.0 - 1e-6)
        b = jnp.clip(b, 1e-6, 1.0 - 1e-6)
        return jnp.sum(a * (jnp.log(a) - jnp.log(b) - 1.0) + b)

    dt = cdist(theta_prj, cluster_center)
    db = cdist(bert_emb, cluster_center)
    pt = dt / jnp.sum(dt, axis=1, keepdims=True)
    pb = db / jnp.sum(db, axis=1, keepdims=True)
    return ((kl(pt, pb) + kl(pb, pt)) * 0.5) * weight_loss_DCR


if __name__ == "__main__":
    keys = jax.random.split(jax.random.PRNGKey(0), 6)

    # Case 1: small shapes (N docs=8, D=32, K=16 clusters); auto tile -> one
    # grid step, outer parallel axis collapses to 1.
    N, D, K = 8, 32, 16
    weight_loss_DCR = 0.5
    theta_prj = jax.random.normal(keys[0], (N, D), dtype=jnp.float32)
    bert_emb = jax.random.normal(keys[1], (N, D), dtype=jnp.float32)
    cluster_center = jax.random.normal(keys[2], (K, D), dtype=jnp.float32)

    loss = jax.block_until_ready(
        dcr_loss(theta_prj, bert_emb, cluster_center, weight_loss_DCR))
    ref = dcr_loss_ref(theta_prj, bert_emb, cluster_center, weight_loss_DCR)
    assert jnp.allclose(loss, ref, rtol=3e-4, atol=1e-5), (loss, ref)

    # Case 2: N not a tile multiple (zero-row padding), tile_n=8 -> 3 real
    # tiles, num_core_splits=2 -> grid (2, 2) with per-outer partial sums.
    N2, D2 = 20, 64
    theta2 = jax.random.normal(keys[3], (N2, D2), dtype=jnp.float32)
    bert2 = jax.random.normal(keys[4], (N2, D2), dtype=jnp.float32)
    center2 = jax.random.normal(keys[5], (K, D2), dtype=jnp.float32)

    loss2 = jax.block_until_ready(
        dcr_loss(theta2, bert2, center2, 1.25, tile_n=8))
    ref2 = dcr_loss_ref(theta2, bert2, center2, 1.25)
    assert jnp.allclose(loss2, ref2, rtol=3e-4, atol=1e-5), (loss2, ref2)

    # Case 3: opt-in bf16 MXU path; compare against the f32 reference applied
    # to bf16-rounded inputs (the values the MXU actually consumes).
    def _rt(x):
        return x.astype(jnp.bfloat16).astype(jnp.float32)

    loss3 = jax.block_until_ready(
        dcr_loss(theta_prj, bert_emb, cluster_center, weight_loss_DCR,
                 matmul_dtype=jnp.bfloat16, tile_n=8))
    ref3 = dcr_loss_ref(_rt(theta_prj), _rt(bert_emb), _rt(cluster_center),
                        weight_loss_DCR)
    assert jnp.allclose(loss3, ref3, rtol=5e-3, atol=5e-4), (loss3, ref3)

    # Compile-time early-return path (weight <= 1e-6).
    zero = dcr_loss(theta_prj, bert_emb, cluster_center, 0.0)
    assert float(zero) == 0.0

    print("KERNEL_OK")
</pallas_src>

<mosaic_0001>
module attributes {stable_mosaic.version = 11 : i64} {
  func.func @_dcr_kernel(%arg0: i32, %arg1: i32, %arg2: memref<8x32xf32, #tpu.memory_space<vmem>>, %arg3: memref<8x32xf32, #tpu.memory_space<vmem>>, %arg4: memref<16x32xf32, #tpu.memory_space<vmem>>, %arg5: memref<16x1xf32, #tpu.memory_space<vmem>>, %arg6: memref<8x128xf32, #tpu.memory_space<vmem>>, %arg7: memref<1x8xf32, #tpu.memory_space<vmem>>) attributes {dimension_semantics = [#tpu.dimension_semantics<parallel>, #tpu.dimension_semantics<arbitrary>], iteration_bounds = array<i64: 1, 1>, scalar_prefetch = 0 : i64, scratch_operands = 1 : i64, tpu.core_type = #tpu.core_type<tc>, window_params = [{transform_indices = @transform_0, window_bounds = array<i64: 8, 32>}, {transform_indices = @transform_1, window_bounds = array<i64: 8, 32>}, {pipeline_mode = #tpu.pipeline_mode<synchronous>, transform_indices = @transform_2, window_bounds = array<i64: 16, 32>}, {pipeline_mode = #tpu.pipeline_mode<synchronous>, transform_indices = @transform_3, window_bounds = array<i64: 16, 1>}, {transform_indices = @transform_4, window_bounds = array<i64: 8, 128>}]} {
    %c0_i32 = arith.constant 0 : i32
    %0 = arith.cmpi eq, %arg1, %c0_i32 : i32
    %1 = arith.extui %0 : i1 to i32
    %c0_i32_0 = arith.constant 0 : i32
    %2 = arith.cmpi ne, %1, %c0_i32_0 : i32
    scf.if %2 {
      %cst_33 = arith.constant 0.000000e+00 : f32
      %75 = vector.broadcast %cst_33 : f32 to vector<1x8xf32>
      %c0_34 = arith.constant 0 : index
      %c0_35 = arith.constant 0 : index
      %76 = vector.load %arg7[%c0_34, %c0_35] : memref<1x8xf32, #tpu.memory_space<vmem>>, vector<1x8xf32>
      tpu.vector_store %arg7[%c0_34, %c0_35], %75 {strides = array<i32>} : memref<1x8xf32, #tpu.memory_space<vmem>>, vector<1x8xf32>,
    } else {
    }
    %c0 = arith.constant 0 : index
    %c0_1 = arith.constant 0 : index
    %3 = vector.load %arg4[%c0, %c0_1] : memref<16x32xf32, #tpu.memory_space<vmem>>, vector<16x32xf32>
    %c0_2 = arith.constant 0 : index
    %c0_3 = arith.constant 0 : index
    %4 = vector.load %arg5[%c0_2, %c0_3] : memref<16x1xf32, #tpu.memory_space<vmem>>, vector<16x1xf32>
    %cst = arith.constant 1.000000e+00 : f32
    %5 = vector.broadcast %cst : f32 to vector<1x32xf32>
    %c0_4 = arith.constant 0 : index
    %c0_5 = arith.constant 0 : index
    %6 = vector.load %arg2[%c0_4, %c0_5] : memref<8x32xf32, #tpu.memory_space<vmem>>, vector<8x32xf32>
    %7 = arith.mulf %6, %6 : vector<8x32xf32>
    %cst_6 = arith.constant dense<0.000000e+00> : vector<1x8xf32>
    %8 = tpu.matmul %5, %7, %cst_6 {dimension_numbers = #tpu.dot_dimension_numbers<[1], [1], [0], [0], [0, 0, 1, 0], [], []>} : vector<1x32xf32>, vector<8x32xf32>, vector<1x8xf32> -> vector<1x8xf32>
    %cst_7 = arith.constant dense<0.000000e+00> : vector<16x8xf32>
    %9 = tpu.matmul %3, %6, %cst_7 {dimension_numbers = #tpu.dot_dimension_numbers<[1], [1], [0], [0], [0, 0, 1, 0], [], []>} : vector<16x32xf32>, vector<8x32xf32>, vector<16x8xf32> -> vector<16x8xf32>
    %10 = vector.broadcast %4 : vector<16x1xf32> to vector<16x8xf32>
    %11 = vector.broadcast %8 : vector<1x8xf32> to vector<16x8xf32>
    %12 = arith.addf %10, %11 : vector<16x8xf32>
    %cst_8 = arith.constant 2.000000e+00 : f32
    %13 = vector.broadcast %cst_8 : f32 to vector<16x8xf32>
    %14 = arith.mulf %13, %9 : vector<16x8xf32>
    %15 = arith.subf %12, %14 : vector<16x8xf32>
    %cst_9 = arith.constant 0.000000e+00 : f32
    %16 = vector.broadcast %cst_9 : f32 to vector<16x8xf32>
    %17 = arith.maximumf %15, %16 : vector<16x8xf32>
    %18 = math.sqrt %17 : vector<16x8xf32>
    %cst_10 = arith.constant dense<0.000000e+00> : vector<8xf32>
    %19 = vector.multi_reduction <add>, %18, %cst_10 [0] : vector<16x8xf32> to vector<8xf32>
    %20 = vector.shape_cast %19 : vector<8xf32> to vector<1x8xf32>
    %cst_11 = arith.constant 1.000000e-30 : f32
    %21 = vector.broadcast %cst_11 : f32 to vector<1x8xf32>
    %22 = arith.maximumf %20, %21 : vector<1x8xf32>
    %23 = tpu.reciprocal %22 {approx = true} : vector<1x8xf32> -> vector<1x8xf32>
    %24 = arith.mulf %22, %23 : vector<1x8xf32>
    %cst_12 = arith.constant 2.000000e+00 : f32
    %25 = vector.broadcast %cst_12 : f32 to vector<1x8xf32>
    %26 = arith.subf %25, %24 : vector<1x8xf32>
    %27 = arith.mulf %23, %26 : vector<1x8xf32>
    %28 = vector.broadcast %27 : vector<1x8xf32> to vector<16x8xf32>
    %29 = arith.mulf %18, %28 : vector<16x8xf32>
    %cst_13 = arith.constant 9.99999997E-7 : f32
    %cst_14 = arith.constant 0.999998986 : f32
    %30 = vector.broadcast %cst_13 : f32 to vector<16x8xf32>
    %31 = arith.maximumf %30, %29 : vector<16x8xf32>
    %32 = vector.broadcast %cst_14 : f32 to vector<16x8xf32>
    %33 = arith.minimumf %32, %31 : vector<16x8xf32>
    %c0_15 = arith.constant 0 : index
    %c0_16 = arith.constant 0 : index
    %34 = vector.load %arg3[%c0_15, %c0_16] : memref<8x32xf32, #tpu.memory_space<vmem>>, vector<8x32xf32>
    %35 = arith.mulf %34, %34 : vector<8x32xf32>
    %cst_17 = arith.constant dense<0.000000e+00> : vector<1x8xf32>
    %36 = tpu.matmul %5, %35, %cst_17 {dimension_numbers = #tpu.dot_dimension_numbers<[1], [1], [0], [0], [0, 0, 1, 0], [], []>} : vector<1x32xf32>, vector<8x32xf32>, vector<1x8xf32> -> vector<1x8xf32>
    %cst_18 = arith.constant dense<0.000000e+00> : vector<16x8xf32>
    %37 = tpu.matmul %3, %34, %cst_18 {dimension_numbers = #tpu.dot_dimension_numbers<[1], [1], [0], [0], [0, 0, 1, 0], [], []>} : vector<16x32xf32>, vector<8x32xf32>, vector<16x8xf32> -> vector<16x8xf32>
    %38 = vector.broadcast %4 : vector<16x1xf32> to vector<16x8xf32>
    %39 = vector.broadcast %36 : vector<1x8xf32> to vector<16x8xf32>
    %40 = arith.addf %38, %39 : vector<16x8xf32>
    %cst_19 = arith.constant 2.000000e+00 : f32
    %41 = vector.broadcast %cst_19 : f32 to vector<16x8xf32>
    %42 = arith.mulf %41, %37 : vector<16x8xf32>
    %43 = arith.subf %40, %42 : vector<16x8xf32>
    %cst_20 = arith.constant 0.000000e+00 : f32
    %44 = vector.broadcast %cst_20 : f32 to vector<16x8xf32>
    %45 = arith.maximumf %43, %44 : vector<16x8xf32>
    %46 = math.sqrt %45 : vector<16x8xf32>
    %cst_21 = arith.constant dense<0.000000e+00> : vector<8xf32>
    %47 = vector.multi_reduction <add>, %46, %cst_21 [0] : vector<16x8xf32> to vector<8xf32>
    %48 = vector.shape_cast %47 : vector<8xf32> to vector<1x8xf32>
    %cst_22 = arith.constant 1.000000e-30 : f32
    %49 = vector.broadcast %cst_22 : f32 to vector<1x8xf32>
    %50 = arith.maximumf %48, %49 : vector<1x8xf32>
    %51 = tpu.reciprocal %50 {approx = true} : vector<1x8xf32> -> vector<1x8xf32>
    %52 = arith.mulf %50, %51 : vector<1x8xf32>
    %cst_23 = arith.constant 2.000000e+00 : f32
    %53 = vector.broadcast %cst_23 : f32 to vector<1x8xf32>
    %54 = arith.subf %53, %52 : vector<1x8xf32>
    %55 = arith.mulf %51, %54 : vector<1x8xf32>
    %56 = vector.broadcast %55 : vector<1x8xf32> to vector<16x8xf32>
    %57 = arith.mulf %46, %56 : vector<16x8xf32>
    %cst_24 = arith.constant 9.99999997E-7 : f32
    %cst_25 = arith.constant 0.999998986 : f32
    %58 = vector.broadcast %cst_24 : f32 to vector<16x8xf32>
    %59 = arith.maximumf %58, %57 : vector<16x8xf32>
    %60 = vector.broadcast %cst_25 : f32 to vector<16x8xf32>
    %61 = arith.minimumf %60, %59 : vector<16x8xf32>
    %62 = arith.subf %33, %61 : vector<16x8xf32>
    %63 = math.log %33 : vector<16x8xf32>
    %64 = math.log %61 : vector<16x8xf32>
    %65 = arith.subf %63, %64 : vector<16x8xf32>
    %66 = arith.mulf %62, %65 : vector<16x8xf32>
    %c0_26 = arith.constant 0 : index
    %c0_27 = arith.constant 0 : index
    %67 = vector.load %arg7[%c0_26, %c0_27] : memref<1x8xf32, #tpu.memory_space<vmem>>, vector<1x8xf32>
    %cst_28 = arith.constant dense<0.000000e+00> : vector<8xf32>
    %68 = vector.multi_reduction <add>, %66, %cst_28 [0] : vector<16x8xf32> to vector<8xf32>
    %69 = vector.shape_cast %68 : vector<8xf32> to vector<1x8xf32>
    %70 = arith.addf %67, %69 : vector<1x8xf32>
    %c0_29 = arith.constant 0 : index
    %c0_30 = arith.constant 0 : index
    %71 = vector.load %arg7[%c0_29, %c0_30] : memref<1x8xf32, #tpu.memory_space<vmem>>, vector<1x8xf32>
    tpu.vector_store %arg7[%c0_29, %c0_30], %70 {strides = array<i32>} : memref<1x8xf32, #tpu.memory_space<vmem>>, vector<1x8xf32>,
    %c0_i32_31 = arith.constant 0 : i32
    %72 = arith.cmpi eq, %arg1, %c0_i32_31 : i32
    %73 = arith.extui %72 : i1 to i32
    %c0_i32_32 = arith.constant 0 : i32
    %74 = arith.cmpi ne, %73, %c0_i32_32 : i32
    scf.if %74 {
      %cst_33 = arith.constant 0.000000e+00 : f32
      %75 = vector.broadcast %cst_33 : f32 to vector<8x128xf32>
      %c0_34 = arith.constant 0 : index
      %c0_35 = arith.constant 0 : index
      %76 = vector.load %arg6[%c0_34, %c0_35] : memref<8x128xf32, #tpu.memory_space<vmem>>, vector<8x128xf32>
      tpu.vector_store %arg6[%c0_34, %c0_35], %75 {strides = array<i32>} : memref<8x128xf32, #tpu.memory_space<vmem>>, vector<8x128xf32>,
      %c0_36 = arith.constant 0 : index
      %c0_37 = arith.constant 0 : index
      %77 = vector.load %arg7[%c0_36, %c0_37] : memref<1x8xf32, #tpu.memory_space<vmem>>, vector<1x8xf32>
      %cst_38 = arith.constant dense<0.000000e+00> : vector<1xf32>
      %78 = vector.multi_reduction <add>, %77, %cst_38 [1] : vector<1x8xf32> to vector<1xf32>
      %79 = vector.shape_cast %78 : vector<1xf32> to vector<1x1xf32>
      %c0_39 = arith.constant 0 : index
      %c0_40 = arith.constant 0 : index
      %80 = vector.load %arg6[%c0_39, %c0_40] : memref<8x128xf32, #tpu.memory_space<vmem>>, vector<1x1xf32>
      tpu.vector_store %arg6[%c0_39, %c0_40], %79 {strides = array<i32>} : memref<8x128xf32, #tpu.memory_space<vmem>>, vector<1x1xf32>,
    } else {
    }
    return
  }
  func.func @transform_0(%arg0: i32, %arg1: i32) -> (i32, i32) {
    %c1_i32 = arith.constant 1 : i32
    %0 = arith.muli %arg0, %c1_i32 : i32
    %1 = arith.addi %0, %arg1 : i32
    %c0_i32 = arith.constant 0 : i32
    %c0_i32_0 = arith.constant 0 : i32
    return %1, %c0_i32 : i32, i32
  }
  func.func @transform_1(%arg0: i32, %arg1: i32) -> (i32, i32) {
    %c1_i32 = arith.constant 1 : i32
    %0 = arith.muli %arg0, %c1_i32 : i32
    %1 = arith.addi %0, %arg1 : i32
    %c0_i32 = arith.constant 0 : i32
    %c0_i32_0 = arith.constant 0 : i32
    return %1, %c0_i32 : i32, i32
  }
  func.func @transform_2(%arg0: i32, %arg1: i32) -> (i32, i32) {
    %c0_i32 = arith.constant 0 : i32
    %c0_i32_0 = arith.constant 0 : i32
    %c0_i32_1 = arith.constant 0 : i32
    return %c0_i32, %c0_i32_0 : i32, i32
  }
  func.func @transform_3(%arg0: i32, %arg1: i32) -> (i32, i32) {
    %c0_i32 = arith.constant 0 : i32
    %c0_i32_0 = arith.constant 0 : i32
    %c0_i32_1 = arith.constant 0 : i32
    return %c0_i32, %c0_i32_0 : i32, i32
  }
  func.func @transform_4(%arg0: i32, %arg1: i32) -> (i32, i32) {
    %c0_i32 = arith.constant 0 : i32
    %c0_i32_0 = arith.constant 0 : i32
    return %arg0, %c0_i32 : i32, i32
  }
}

</mosaic_0001>

<llo_original>
// kernel: tpu_custom_call.1
$region0: #{tpu_custom_call.1}
  #allocation0 [shape = 'u32[]', space=smem, size = 0x4, offset = 0x4, fixed_abs, tag = 'smem constant byte address 0x4 - core index']
  #allocation1 [shape = 'u32[144,128]{1,0:T(1,128)}', space=vmem, size = 0x12000, scoped, tag = 'internal scratch']
  #allocation2 [shape = 'f32[1,8]{1,0:T(1,128)}', space=vmem, size = 0x200, scoped, tag = 'scratch operand']
  %s0 = inlined_call_operand.vmem [shape: f32[8,32], index: 0, kind: input, shape index: {}]
  %s1 = inlined_call_operand.hbm [shape: f32[8,32], index: 1, kind: input, shape index: {}]
  %s2 = inlined_call_operand.vmem [shape: f32[16,32], index: 2, kind: input, shape index: {}]
  %s3 = inlined_call_operand.vmem [shape: f32[16,1], index: 3, kind: input, shape index: {}]
  %s4 = inlined_call_operand.hbm [shape: f32[8,128], index: 4, kind: output, shape index: {}]
  %s5 = sld [smem:[#allocation0]]
  $region38: #{tpu_custom_call.1} parent=0
    _
  %s7 = ssub.s32 1, %s5
  %s8 = scalar_select 0, %s7, %s5
  $region1: #{tpu_custom_call.1} parent=0
    #allocation3 [shape = 'u8[4096]{0}', space=vmem, size = 0x1000, scoped, tag = 'input window, operand 1, single buffered']
    #allocation4 [shape = 's32[1]{0}', space=sflag, size = 0x4, scoped, tag = 'scoped memory for tpu_custom_call.1']
    #allocation5 [shape = 's32[1]{0}', space=sflag, size = 0x4, scoped, tag = 'scoped memory for tpu_custom_call.1']
    #allocation6 [shape = 'u8[4096]{0}', space=vmem, size = 0x1000, scoped, tag = 'output window, operand 0, single buffered']
    %9 = vsyncpa [#allocation4], 0
    %10 = vsyncpa [#allocation5], 0
    // Predicated region
    $region2: #{tpu_custom_call.1} parent=1 // pred_check
      _
    $region3: #{tpu_custom_call.1} parent=1 // pred_check_branch
      %12 = sbr.rel (0) target = $region5
    $region4: #{tpu_custom_call.1} parent=1 // pred_region
      %s13 = sadd.s32 0, 0
      %p14 = scmp.lt.s32.totalorder %s13, 0
      %s15 = scalar_select %p14, %s13, 0
      %s16 = smul.addr %s15, 8
      %s17 = scalar_lea.vmem %s0, %s16
      %s18 = sadd.s32 0, 0
    $region5: #{tpu_custom_call.1} parent=1 // pred_fallthru
      _
    // Predicated region
    $region6: #{tpu_custom_call.1} parent=1 // pred_check
      _
    $region7: #{tpu_custom_call.1} parent=1 // pred_check_branch
      %20 = sbr.rel (0) target = $region9
    $region8: #{tpu_custom_call.1} parent=1 // pred_region
      %s21 = sadd.s32 0, 0
      %s23 = ssub.s32 128, 128
      %24 = vsyncadd [#allocation4], %s23
      %s25 = smul.addr %s21, 128
      %s26 = scalar_lea.hbm %s1, %s25
      %s28 = sshll.u32 [#allocation3], 4
      %s29 = int_to_ptr.vmem [resolvable:$true] %s28
      %31 = dma.hbm_to_vmem [thread:$0]  %s26, 128, %s29, [#allocation4]
    $region9: #{tpu_custom_call.1} parent=1 // pred_fallthru
      _
    // Predicated region
    $region10: #{tpu_custom_call.1} parent=1 // pred_check
      _
    $region11: #{tpu_custom_call.1} parent=1 // pred_check_branch
      %33 = sbr.rel (0) target = $region13
    $region12: #{tpu_custom_call.1} parent=1 // pred_region
      _
    $region13: #{tpu_custom_call.1} parent=1 // pred_fallthru
      _
    // Predicated region
    $region14: #{tpu_custom_call.1} parent=1 // pred_check
      _
    $region15: #{tpu_custom_call.1} parent=1 // pred_check_branch
      %35 = sbr.rel (0) target = $region17
    $region16: #{tpu_custom_call.1} parent=1 // pred_region
      _
    $region17: #{tpu_custom_call.1} parent=1 // pred_fallthru
      _
    // Predicated region
    $region18: #{tpu_custom_call.1} parent=1 // pred_check
      _
    $region19: #{tpu_custom_call.1} parent=1 // pred_check_branch
      %37 = sbr.rel (0) target = $region21
    $region20: #{tpu_custom_call.1} parent=1 // pred_region
      %38 = dma.done [#allocation4], 128
    $region21: #{tpu_custom_call.1} parent=1 // pred_fallthru
      _
    %s39 = sadd.s32 0, 0
    %p40 = scmp.lt.s32.totalorder %s39, 0
    %s41 = scalar_select %p40, %s39, 0
    %s42 = smul.addr %s41, 8
    %s43 = scalar_lea.vmem %s0, %s42
    %s44 = sadd.s32 0, 0
    %p45 = scmp.lt.s32.totalorder %s44, 0
    %s46 = scalar_select %p45, %s44, 0
    %s47 = smul.addr %s46, 8
    %s48 = scalar_lea.vmem %s0, %s47
    %s49 = sadd.s32 0, 0
    %s50 = sadd.s32 0, 0
    %p51 = scmp.eq.s32.totalorder 0, 0
    // Predicated region
    $region22: #{tpu_custom_call.1} parent=1 // pred_check
      %p52 = pneg %p51
    $region23: #{tpu_custom_call.1} parent=1 // pred_check_branch
      %54 = sbr.rel (%p52) target = $region25
    $region24: #{tpu_custom_call.1} parent=1 // pred_region
      %vm55 = vcmask 57344
      %56 = vst.msk [vmem:[#allocation2] sm:$0x1] %vm55, 0.0
    $region25: #{tpu_custom_call.1} parent=1 // pred_fallthru
      _
    %v57 = vld [vmem:[%s2] sm:$0xff]
    %v58 = vld [vmem:[%s2 + $0x8] sm:$0xff]
    %v59 = vld [vmem:[%s3] sm:$0xff]
    %v60 = vld [vmem:[%s3 + $0x8] sm:$0xff]
    %v61 = vld [vmem:[%s48] sm:$0xff]
    %v62 = vmul.f32 %v61, %v61
    %vm63 = vcmask 261120
    %v65 = vsel %vm63, 1.0, 0
    %v68 = vsel %vm63, %v62, 0
    %70 = vmatprep.subr.mxu0 0.0
    %71 = vmatpush1.xpose.msra.mxu0 %v68
    %72 = vmatprep.subr.mxu0 0.0
    %73 = vmatpush1.xpose.msra.mxu0 0.0
    %74 = vmatprep.subr.mxu0 0.0
    %75 = vmatpush1.xpose.msra.mxu0 0.0
    %76 = vmatprep.subr.mxu0 0.0
    %77 = vmatpush1.xpose.msra.mxu0 0.0
    %78 = vmatprep.subr.mxu0 0.0
    %79 = vmatpush1.xpose.msra.mxu0 0.0
    %80 = vmatprep.subr.mxu0 0.0
    %81 = vmatpush1.xpose.msra.mxu0 0.0
    %82 = vmatprep.subr.mxu0 0.0
    %83 = vmatpush1.xpose.msra.mxu0 0.0
    %84 = vmatprep.subr.mxu0 0.0
    %85 = vmatpush1.xpose.msra.mxu0 0.0
    %86 = vmatprep.subr.mxu0 0.0
    %87 = vmatpush1.xpose.msra.mxu0 0.0
    %88 = vmatprep.subr.mxu0 0.0
    %89 = vmatpush1.xpose.msra.mxu0 0.0
    %90 = vmatprep.subr.mxu0 0.0
    %91 = vmatpush1.xpose.msra.mxu0 0.0
    %92 = vmatprep.subr.mxu0 0.0
    %93 = vmatpush1.xpose.msra.mxu0 0.0
    %94 = vmatprep.subr.mxu0 0.0
    %95 = vmatpush1.xpose.msra.mxu0 0.0
    %96 = vmatprep.subr.mxu0 0.0
    %97 = vmatpush1.xpose.msra.mxu0 0.0
    %98 = vmatprep.subr.mxu0 0.0
    %99 = vmatpush1.xpose.msra.mxu0 0.0
    %100 = vmatprep.subr.mxu0 0.0
    %101 = vmatpush1.xpose.msra.mxu0 0.0
    %102 = vmatprep.subr.mxu0 0.0
    %103 = vmatpush1.xpose.msra.mxu0 0.0
    %104 = vmatprep.subr.mxu0 0.0
    %105 = vmatpush1.xpose.msra.mxu0 0.0
    %106 = vmatprep.subr.mxu0 0.0
    %107 = vmatpush1.xpose.msra.mxu0 0.0
    %108 = vmatprep.subr.mxu0 0.0
    %109 = vmatpush1.xpose.msra.mxu0 0.0
    %110 = vmatprep.subr.mxu0 0.0
    %111 = vmatpush1.xpose.msra.mxu0 0.0
    %112 = vmatprep.subr.mxu0 0.0
    %113 = vmatpush1.xpose.msra.mxu0 0.0
    %114 = vmatprep.subr.mxu0 0.0
    %115 = vmatpush1.xpose.msra.mxu0 0.0
    %116 = vmatprep.subr.mxu0 0.0
    %117 = vmatpush1.xpose.msra.mxu0 0.0
    %118 = vmatprep.subr.mxu0 0.0
    %119 = vmatpush1.xpose.msra.mxu0 0.0
    %120 = vmatprep.subr.mxu0 0.0
    %121 = vmatpush1.xpose.msra.mxu0 0.0
    %122 = vmatprep.subr.mxu0 0.0
    %123 = vmatpush1.xpose.msra.mxu0 0.0
    %124 = vmatprep.subr.mxu0 0.0
    %125 = vmatpush1.xpose.msra.mxu0 0.0
    %126 = vmatprep.subr.mxu0 0.0
    %127 = vmatpush1.xpose.msra.mxu0 0.0
    %128 = vmatprep.subr.mxu0 0.0
    %129 = vmatpush1.xpose.msra.mxu0 0.0
    %130 = vmatprep.subr.mxu0 0.0
    %131 = vmatpush1.xpose.msra.mxu0 0.0
    %132 = vmatprep.subr.mxu0 0.0
    %133 = vmatpush1.xpose.msra.mxu0 0.0
    %134 = vmatprep.mubr.f32.mxu0 0.0
    %135 = vmatmul.mubr.f32.gmra.mrb[0].mxu0 %v65
    %v136 = vpop.f32.mrb[0].mxu0
    %v137 = vadd.f32 0.0, %v136
    %v138 = vpop.f32.mrb[0].mxu0
    %139 = vdwg.mxu0
    %v141 = vsel %vm63, %v57, 0
    %v144 = vsel %vm63, %v58, 0
    %v147 = vsel %vm63, %v61, 0
    %149 = vmatprep.subr.mxu0 0.0
    %150 = vmatpush1.xpose.msra.mxu0 %v147
    %151 = vmatprep.subr.mxu0 0.0
    %152 = vmatpush1.xpose.msra.mxu0 0.0
    %153 = vmatprep.subr.mxu0 0.0
    %154 = vmatpush1.xpose.msra.mxu0 0.0
    %155 = vmatprep.subr.mxu0 0.0
    %156 = vmatpush1.xpose.msra.mxu0 0.0
    %157 = vmatprep.subr.mxu0 0.0
    %158 = vmatpush1.xpose.msra.mxu0 0.0
    %159 = vmatprep.subr.mxu0 0.0
    %160 = vmatpush1.xpose.msra.mxu0 0.0
    %161 = vmatprep.subr.mxu0 0.0
    %162 = vmatpush1.xpose.msra.mxu0 0.0
    %163 = vmatprep.subr.mxu0 0.0
    %164 = vmatpush1.xpose.msra.mxu0 0.0
    %165 = vmatprep.subr.mxu0 0.0
    %166 = vmatpush1.xpose.msra.mxu0 0.0
    %167 = vmatprep.subr.mxu0 0.0
    %168 = vmatpush1.xpose.msra.mxu0 0.0
    %169 = vmatprep.subr.mxu0 0.0
    %170 = vmatpush1.xpose.msra.mxu0 0.0
    %171 = vmatprep.subr.mxu0 0.0
    %172 = vmatpush1.xpose.msra.mxu0 0.0
    %173 = vmatprep.subr.mxu0 0.0
    %174 = vmatpush1.xpose.msra.mxu0 0.0
    %175 = vmatprep.subr.mxu0 0.0
    %176 = vmatpush1.xpose.msra.mxu0 0.0
    %177 = vmatprep.subr.mxu0 0.0
    %178 = vmatpush1.xpose.msra.mxu0 0.0
    %179 = vmatprep.subr.mxu0 0.0
    %180 = vmatpush1.xpose.msra.mxu0 0.0
    %181 = vmatprep.subr.mxu0 0.0
    %182 = vmatpush1.xpose.msra.mxu0 0.0
    %183 = vmatprep.subr.mxu0 0.0
    %184 = vmatpush1.xpose.msra.mxu0 0.0
    %185 = vmatprep.subr.mxu0 0.0
    %186 = vmatpush1.xpose.msra.mxu0 0.0
    %187 = vmatprep.subr.mxu0 0.0
    %188 = vmatpush1.xpose.msra.mxu0 0.0
    %189 = vmatprep.subr.mxu0 0.0
    %190 = vmatpush1.xpose.msra.mxu0 0.0
    %191 = vmatprep.subr.mxu0 0.0
    %192 = vmatpush1.xpose.msra.mxu0 0.0
    %193 = vmatprep.subr.mxu0 0.0
    %194 = vmatpush1.xpose.msra.mxu0 0.0
    %195 = vmatprep.subr.mxu0 0.0
    %196 = vmatpush1.xpose.msra.mxu0 0.0
    %197 = vmatprep.subr.mxu0 0.0
    %198 = vmatpush1.xpose.msra.mxu0 0.0
    %199 = vmatprep.subr.mxu0 0.0
    %200 = vmatpush1.xpose.msra.mxu0 0.0
    %201 = vmatprep.subr.mxu0 0.0
    %202 = vmatpush1.xpose.msra.mxu0 0.0
    %203 = vmatprep.subr.mxu0 0.0
    %204 = vmatpush1.xpose.msra.mxu0 0.0
    %205 = vmatprep.subr.mxu0 0.0
    %206 = vmatpush1.xpose.msra.mxu0 0.0
    %207 = vmatprep.subr.mxu0 0.0
    %208 = vmatpush1.xpose.msra.mxu0 0.0
    %209 = vmatprep.subr.mxu0 0.0
    %210 = vmatpush1.xpose.msra.mxu0 0.0
    %211 = vmatprep.subr.mxu0 0.0
    %212 = vmatpush1.xpose.msra.mxu0 0.0
    %213 = vmatprep.mubr.f32.mxu0 0.0
    %214 = vmatmul.mubr.f32.gmra.mrb[0].mxu0 %v141
    %v215 = vpop.f32.mrb[0].mxu0
    %v216 = vadd.f32 0.0, %v215
    %v217 = vpop.f32.mrb[0].mxu0
    %218 = vmatprep.mubr.f32.mxu0 0.0
    %219 = vmatmul.mubr.f32.gmra.mrb[0].mxu0 %v144
    %v220 = vpop.f32.mrb[0].mxu0
    %v221 = vadd.f32 0.0, %v220
    %v222 = vpop.f32.mrb[0].mxu0
    %223 = vdwg.mxu0
    %225 = vset.pattern.permute.xlu0 0
    %226 = vperm.xlu0 %225, %v59
    %v227 = vpop.permute.xlu0 %226
    %230 = vset.pattern.permute.xlu0 0
    %231 = vperm.xlu0 %230, %v60
    %v232 = vpop.permute.xlu0 %231
    %v234 = vlaneseq
    %v235 = vshrl.u32 %v234, 7
    %v236 = vsub.s32 0, %v235
    %v237 = vrot.slane %v137, %v236
    %v238 = vadd.f32 %v227, %v237
    %v239 = vadd.f32 %v232, %v237
    %v240 = vmul.f32 %v216, 2.0
    %v241 = vmul.f32 %v221, 2.0
    %v242 = vsub.f32 %v238, %v240
    %v243 = vsub.f32 %v239, %v241
    %v244 = vmax.f32 %v242, 0.0
    %v245 = vmax.f32 %v243, 0.0
    %v246 = vrsqrt.pop %v244
    %v247 = vmul.f32 %v244, %v246
    %vm248 = vcmp.eq.f32.partialorder %v244, inf
    %v249 = vsel %vm248, %v244, %v247
    %vm250 = vcmp.eq.f32.partialorder %v244, 0.0
    %v251 = vand.u32 %v244, 2147483648
    %v252 = vsel %vm250, %v251, %v249
    %v253 = vrsqrt.pop %v245
    %v254 = vmul.f32 %v245, %v253
    %vm255 = vcmp.eq.f32.partialorder %v245, inf
    %v256 = vsel %vm255, %v245, %v254
    %vm257 = vcmp.eq.f32.partialorder %v245, 0.0
    %v258 = vand.u32 %v245, 2147483648
    %v259 = vsel %vm257, %v258, %v256
    %vm260 = vcmask 64512
    %v261 = vsel %vm260, %v252, 0.0
    %v262 = vsel %vm260, %v259, 0.0
    %v263 = vadd.f32 %v261, %v262
    %v264 = vrot.slane %v263, 4
    %v265 = vadd.f32 %v263, %v264
    %v266 = vrot.slane %v265, 2
    %v267 = vadd.f32 %v265, %v266
    %v268 = vrot.slane %v267, 1
    %v269 = vadd.f32 %v267, %v268
    %v270 = vmax.f32 %v269, 1e-30
    %v271 = vrcp.pop %v270
    %v272 = vmul.f32 %v270, %v271
    %v273 = vsub.f32 2.0, %v272
    %v274 = vmul.f32 %v271, %v273
    %v275 = vmul.f32 %v252, %v274
    %v276 = vmul.f32 %v259, %v274
    %v277 = vmax.f32 %v275, 1e-06
    %v278 = vmax.f32 %v276, 1e-06
    %v279 = vmin.f32 %v277, 0.999999
    %v280 = vmin.f32 %v278, 0.999999
    %v281 = vld [vmem:[#allocation3] sm:$0xff]
    %v282 = vmul.f32 %v281, %v281
    %v284 = vsel %vm63, %v282, 0
    %286 = vmatprep.subr.mxu0 0.0
    %287 = vmatpush1.xpose.msra.mxu0 %v284
    %288 = vmatprep.subr.mxu0 0.0
    %289 = vmatpush1.xpose.msra.mxu0 0.0
    %290 = vmatprep.subr.mxu0 0.0
    %291 = vmatpush1.xpose.msra.mxu0 0.0
    %292 = vmatprep.subr.mxu0 0.0
    %293 = vmatpush1.xpose.msra.mxu0 0.0
    %294 = vmatprep.subr.mxu0 0.0
    %295 = vmatpush1.xpose.msra.mxu0 0.0
    %296 = vmatprep.subr.mxu0 0.0
    %297 = vmatpush1.xpose.msra.mxu0 0.0
    %298 = vmatprep.subr.mxu0 0.0
    %299 = vmatpush1.xpose.msra.mxu0 0.0
    %300 = vmatprep.subr.mxu0 0.0
    %301 = vmatpush1.xpose.msra.mxu0 0.0
    %302 = vmatprep.subr.mxu0 0.0
    %303 = vmatpush1.xpose.msra.mxu0 0.0
    %304 = vmatprep.subr.mxu0 0.0
    %305 = vmatpush1.xpose.msra.mxu0 0.0
    %306 = vmatprep.subr.mxu0 0.0
    %307 = vmatpush1.xpose.msra.mxu0 0.0
    %308 = vmatprep.subr.mxu0 0.0
    %309 = vmatpush1.xpose.msra.mxu0 0.0
    %310 = vmatprep.subr.mxu0 0.0
    %311 = vmatpush1.xpose.msra.mxu0 0.0
    %312 = vmatprep.subr.mxu0 0.0
    %313 = vmatpush1.xpose.msra.mxu0 0.0
    %314 = vmatprep.subr.mxu0 0.0
    %315 = vmatpush1.xpose.msra.mxu0 0.0
    %316 = vmatprep.subr.mxu0 0.0
    %317 = vmatpush1.xpose.msra.mxu0 0.0
    %318 = vmatprep.subr.mxu0 0.0
    %319 = vmatpush1.xpose.msra.mxu0 0.0
    %320 = vmatprep.subr.mxu0 0.0
    %321 = vmatpush1.xpose.msra.mxu0 0.0
    %322 = vmatprep.subr.mxu0 0.0
    %323 = vmatpush1.xpose.msra.mxu0 0.0
    %324 = vmatprep.subr.mxu0 0.0
    %325 = vmatpush1.xpose.msra.mxu0 0.0
    %326 = vmatprep.subr.mxu0 0.0
    %327 = vmatpush1.xpose.msra.mxu0 0.0
    %328 = vmatprep.subr.mxu0 0.0
    %329 = vmatpush1.xpose.msra.mxu0 0.0
    %330 = vmatprep.subr.mxu0 0.0
    %331 = vmatpush1.xpose.msra.mxu0 0.0
    %332 = vmatprep.subr.mxu0 0.0
    %333 = vmatpush1.xpose.msra.mxu0 0.0
    %334 = vmatprep.subr.mxu0 0.0
    %335 = vmatpush1.xpose.msra.mxu0 0.0
    %336 = vmatprep.subr.mxu0 0.0
    %337 = vmatpush1.xpose.msra.mxu0 0.0
    %338 = vmatprep.subr.mxu0 0.0
    %339 = vmatpush1.xpose.msra.mxu0 0.0
    %340 = vmatprep.subr.mxu0 0.0
    %341 = vmatpush1.xpose.msra.mxu0 0.0
    %342 = vmatprep.subr.mxu0 0.0
    %343 = vmatpush1.xpose.msra.mxu0 0.0
    %344 = vmatprep.subr.mxu0 0.0
    %345 = vmatpush1.xpose.msra.mxu0 0.0
    %346 = vmatprep.subr.mxu0 0.0
    %347 = vmatpush1.xpose.msra.mxu0 0.0
    %348 = vmatprep.subr.mxu0 0.0
    %349 = vmatpush1.xpose.msra.mxu0 0.0
    %350 = vmatprep.mubr.f32.mxu0 0.0
    %351 = vmatmul.mubr.f32.gmra.mrb[0].mxu0 %v65
    %v352 = vpop.f32.mrb[0].mxu0
    %v353 = vadd.f32 0.0, %v352
    %v354 = vpop.f32.mrb[0].mxu0
    %355 = vdwg.mxu0
    %v357 = vsel %vm63, %v281, 0
    %359 = vmatprep.subr.mxu0 0.0
    %360 = vmatpush1.xpose.msra.mxu0 %v357
    %361 = vmatprep.subr.mxu0 0.0
    %362 = vmatpush1.xpose.msra.mxu0 0.0
    %363 = vmatprep.subr.mxu0 0.0
    %364 = vmatpush1.xpose.msra.mxu0 0.0
    %365 = vmatprep.subr.mxu0 0.0
    %366 = vmatpush1.xpose.msra.mxu0 0.0
    %367 = vmatprep.subr.mxu0 0.0
    %368 = vmatpush1.xpose.msra.mxu0 0.0
    %369 = vmatprep.subr.mxu0 0.0
    %370 = vmatpush1.xpose.msra.mxu0 0.0
    %371 = vmatprep.subr.mxu0 0.0
    %372 = vmatpush1.xpose.msra.mxu0 0.0
    %373 = vmatprep.subr.mxu0 0.0
    %374 = vmatpush1.xpose.msra.mxu0 0.0
    %375 = vmatprep.subr.mxu0 0.0
    %376 = vmatpush1.xpose.msra.mxu0 0.0
    %377 = vmatprep.subr.mxu0 0.0
    %378 = vmatpush1.xpose.msra.mxu0 0.0
    %379 = vmatprep.subr.mxu0 0.0
    %380 = vmatpush1.xpose.msra.mxu0 0.0
    %381 = vmatprep.subr.mxu0 0.0
    %382 = vmatpush1.xpose.msra.mxu0 0.0
    %383 = vmatprep.subr.mxu0 0.0
    %384 = vmatpush1.xpose.msra.mxu0 0.0
    %385 = vmatprep.subr.mxu0 0.0
    %386 = vmatpush1.xpose.msra.mxu0 0.0
    %387 = vmatprep.subr.mxu0 0.0
    %388 = vmatpush1.xpose.msra.mxu0 0.0
    %389 = vmatprep.subr.mxu0 0.0
    %390 = vmatpush1.xpose.msra.mxu0 0.0
    %391 = vmatprep.subr.mxu0 0.0
    %392 = vmatpush1.xpose.msra.mxu0 0.0
    %393 = vmatprep.subr.mxu0 0.0
    %394 = vmatpush1.xpose.msra.mxu0 0.0
    %395 = vmatprep.subr.mxu0 0.0
    %396 = vmatpush1.xpose.msra.mxu0 0.0
    %397 = vmatprep.subr.mxu0 0.0
    %398 = vmatpush1.xpose.msra.mxu0 0.0
    %399 = vmatprep.subr.mxu0 0.0
    %400 = vmatpush1.xpose.msra.mxu0 0.0
    %401 = vmatprep.subr.mxu0 0.0
    %402 = vmatpush1.xpose.msra.mxu0 0.0
    %403 = vmatprep.subr.mxu0 0.0
    %404 = vmatpush1.xpose.msra.mxu0 0.0
    %405 = vmatprep.subr.mxu0 0.0
    %406 = vmatpush1.xpose.msra.mxu0 0.0
    %407 = vmatprep.subr.mxu0 0.0
    %408 = vmatpush1.xpose.msra.mxu0 0.0
    %409 = vmatprep.subr.mxu0 0.0
    %410 = vmatpush1.xpose.msra.mxu0 0.0
    %411 = vmatprep.subr.mxu0 0.0
    %412 = vmatpush1.xpose.msra.mxu0 0.0
    %413 = vmatprep.subr.mxu0 0.0
    %414 = vmatpush1.xpose.msra.mxu0 0.0
    %415 = vmatprep.subr.mxu0 0.0
    %416 = vmatpush1.xpose.msra.mxu0 0.0
    %417 = vmatprep.subr.mxu0 0.0
    %418 = vmatpush1.xpose.msra.mxu0 0.0
    %419 = vmatprep.subr.mxu0 0.0
    %420 = vmatpush1.xpose.msra.mxu0 0.0
    %421 = vmatprep.subr.mxu0 0.0
    %422 = vmatpush1.xpose.msra.mxu0 0.0
    %423 = vmatprep.mubr.f32.mxu0 0.0
    %424 = vmatmul.mubr.f32.gmra.mrb[0].mxu0 %v141
    %v425 = vpop.f32.mrb[0].mxu0
    %v426 = vadd.f32 0.0, %v425
    %v427 = vpop.f32.mrb[0].mxu0
    %428 = vmatprep.mubr.f32.mxu0 0.0
    %429 = vmatmul.mubr.f32.gmra.mrb[0].mxu0 %v144
    %v430 = vpop.f32.mrb[0].mxu0
    %v431 = vadd.f32 0.0, %v430
    %v432 = vpop.f32.mrb[0].mxu0
    %433 = vdwg.mxu0
    %v434 = vlaneseq
    %v435 = vshrl.u32 %v434, 7
    %v436 = vsub.s32 0, %v435
    %v437 = vrot.slane %v353, %v436
    %v438 = vadd.f32 %v227, %v437
    %v439 = vadd.f32 %v232, %v437
    %v440 = vmul.f32 %v426, 2.0
    %v441 = vmul.f32 %v431, 2.0
    %v442 = vsub.f32 %v438, %v440
    %v443 = vsub.f32 %v439, %v441
    %v444 = vmax.f32 %v442, 0.0
    %v445 = vmax.f32 %v443, 0.0
    %v446 = vrsqrt.pop %v444
    %v447 = vmul.f32 %v444, %v446
    %vm448 = vcmp.eq.f32.partialorder %v444, inf
    %v449 = vsel %vm448, %v444, %v447
    %vm450 = vcmp.eq.f32.partialorder %v444, 0.0
    %v451 = vand.u32 %v444, 2147483648
    %v452 = vsel %vm450, %v451, %v449
    %v453 = vrsqrt.pop %v445
    %v454 = vmul.f32 %v445, %v453
    %vm455 = vcmp.eq.f32.partialorder %v445, inf
    %v456 = vsel %vm455, %v445, %v454
    %vm457 = vcmp.eq.f32.partialorder %v445, 0.0
    %v458 = vand.u32 %v445, 2147483648
    %v459 = vsel %vm457, %v458, %v456
    %v460 = vsel %vm260, %v452, 0.0
    %v461 = vsel %vm260, %v459, 0.0
    %v462 = vadd.f32 %v460, %v461
    %v463 = vrot.slane %v462, 4
    %v464 = vadd.f32 %v462, %v463
    %v465 = vrot.slane %v464, 2
    %v466 = vadd.f32 %v464, %v465
    %v467 = vrot.slane %v466, 1
    %v468 = vadd.f32 %v466, %v467
    %v469 = vmax.f32 %v468, 1e-30
    %v470 = vrcp.pop %v469
    %v471 = vmul.f32 %v469, %v470
    %v472 = vsub.f32 2.0, %v471
    %v473 = vmul.f32 %v470, %v472
    %v474 = vmul.f32 %v452, %v473
    %v475 = vmul.f32 %v459, %v473
    %v476 = vmax.f32 %v474, 1e-06
    %v477 = vmax.f32 %v475, 1e-06
    %v478 = vmin.f32 %v476, 0.999999
    %v479 = vmin.f32 %v477, 0.999999
    %v480 = vsub.f32 %v279, %v478
    %v481 = vsub.f32 %v280, %v479
    %v482 = vlog2.pop %v279
    %v483 = vmul.f32 %v482, 0.6931472
    %v484 = vlog2.pop %v280
    %v485 = vmul.f32 %v484, 0.6931472
    %v486 = vlog2.pop %v478
    %v487 = vmul.f32 %v486, 0.6931472
    %v488 = vlog2.pop %v479
    %v489 = vmul.f32 %v488, 0.6931472
    %v490 = vsub.f32 %v483, %v487
    %v491 = vsub.f32 %v485, %v489
    %v492 = vmul.f32 %v480, %v490
    %v493 = vmul.f32 %v481, %v491
    %v494 = vld [vmem:[#allocation2] sm:$0x1]
    %v495 = vsel %vm260, %v492, 0.0
    %v496 = vsel %vm260, %v493, 0.0
    %v497 = vadd.f32 %v495, %v496
    %v498 = vrot.slane %v497, 4
    %v499 = vadd.f32 %v497, %v498
    %v500 = vrot.slane %v499, 2
    %v501 = vadd.f32 %v499, %v500
    %v502 = vrot.slane %v501, 1
    %v503 = vadd.f32 %v501, %v502
    %v504 = vadd.f32 %v494, %v503
    %vm505 = vcmask 57344
    %506 = vst.msk [vmem:[#allocation2] sm:$0x1] %vm505, %v504
    // Predicated region
    $region26: #{tpu_custom_call.1} parent=1 // pred_check
      %p507 = pneg %p51
    $region27: #{tpu_custom_call.1} parent=1 // pred_check_branch
      %509 = sbr.rel (%p507) target = $region29
    $region28: #{tpu_custom_call.1} parent=1 // pred_region
      %510 = vst [vmem:[#allocation6] sm:$0xff] 0.0
      %v511 = vld [vmem:[#allocation2] sm:$0x1]
      %v512 = vsel %vm505, %v511, 0.0
      %513 = vadd.xlane.f32.xlu0 %v512
      %v514 = vpop.xlane.xlu0 %513
      %vm515 = vcmask 0
      %516 = vst.msk [vmem:[#allocation6] sm:$0x1] %vm515, %v514
    $region29: #{tpu_custom_call.1} parent=1 // pred_fallthru
      _
    // Predicated region
    $region30: #{tpu_custom_call.1} parent=1 // pred_check
      _
    $region31: #{tpu_custom_call.1} parent=1 // pred_check_branch
      %518 = sbr.rel (0) target = $region33
    $region32: #{tpu_custom_call.1} parent=1 // pred_region
      %s520 = ssub.s32 128, 128
      %521 = vsyncadd [#allocation5], %s520
      %s523 = sshll.u32 [#allocation6], 4
      %s524 = int_to_ptr.vmem [resolvable:$true] %s523
      %526 = dma.vmem_to_hbm [thread:$0]  %s524, 128, %s4, [#allocation5]
    $region33: #{tpu_custom_call.1} parent=1 // pred_fallthru
      _
    // Predicated region
    $region34: #{tpu_custom_call.1} parent=1 // pred_check
      _
    $region35: #{tpu_custom_call.1} parent=1 // pred_check_branch
      %528 = sbr.rel (0) target = $region37
    $region36: #{tpu_custom_call.1} parent=1 // pred_region
      %529 = dma.done [#allocation5], 128
    $region37: #{tpu_custom_call.1} parent=1 // pred_fallthru
      _
    %530 = vsyncpa [#allocation4], 1
    %531 = vsyncpa [#allocation5], 1

</llo_original>
